<compile_context>
chip_gen: v7x
topology: tpu7x:2x2x1
jax: 0.10.0
libtpu: 0.0.40
codegen_flags: <defaults>
</compile_context>

<pallas_src>
import functools

import jax
import jax.numpy as jnp
from jax.experimental import pallas as pl
from jax.experimental.pallas import tpu as pltpu


def _leaky_seq_kernel(act_ref, x_ref, out_ref, *, alpha, beta):
    """Fused T-step leaky-integrate update.

    grid=(T,).  `out_ref` has a constant index_map, so the activation stays
    resident in VMEM across all T steps and is written back to HBM only once.
    `act_ref` (aliased with the output HBM buffer) seeds it at t == 0.
    """
    t = pl.program_id(0)

    @pl.when(t == 0)
    def _():
        out_ref[...] = act_ref[...]

    act = out_ref[...]
    decayed = beta * act
    spiked = decayed + (1.0 - decayed) * alpha          # value where x == 1
    # int8 mask -> select in-kernel (no wrapper-side f32 cast of the mask).
    out_ref[...] = jnp.where(x_ref[0] != 0, spiked, decayed)


class LeakyPallas:
    """Stateful wrapper mirroring the PyTorch module."""

    def __init__(self, shape=(5, 5), alpha=0.2, beta=0.9):
        self.alpha = float(alpha)
        self.beta = float(beta)
        self.shape = tuple(shape)
        # deterministic init, identical to torch.zeros(shape)
        self.activation = jnp.zeros(self.shape, dtype=jnp.float32)
        self._runners = {}  # one compiled fused kernel per sequence length T

    def _build_runner(self, T):
        R, C = self.shape
        kernel = functools.partial(_leaky_seq_kernel, alpha=self.alpha, beta=self.beta)
        call = pl.pallas_call(
            kernel,
            out_shape=jax.ShapeDtypeStruct(self.shape, jnp.float32),
            grid_spec=pltpu.PrefetchScalarGridSpec(
                num_scalar_prefetch=0,
                grid=(T,),
                in_specs=[
                    # activation: full block, constant index -> fetched once
                    pl.BlockSpec((R, C), lambda t: (0, 0)),
                    # spike mask for step t (int8, 1 byte/elem)
                    pl.BlockSpec((1, R, C), lambda t: (t, 0, 0)),
                ],
                # constant index -> VMEM-resident accumulator, one HBM write-back
                out_specs=pl.BlockSpec((R, C), lambda t: (0, 0)),
            ),
            # activation in -> activation out: update the state buffer in place
            input_output_aliases={0: 0},
            compiler_params=pltpu.CompilerParams(
                # T is a sequential recurrence; spatial axes (if the state is
                # ever scaled up and tiled) would be marked "parallel" for v7x.
                dimension_semantics=("arbitrary",),
            ),
        )

        @functools.partial(jax.jit, donate_argnums=(0,))
        def run(act, x_seq_i8):
            return call(act, x_seq_i8)

        return run

    def forward_sequence(self, x_seq):
        """Apply T leaky-integrate steps in one fused kernel. x_seq: (T, *shape) bool."""
        assert x_seq.shape[1:] == self.shape
        assert x_seq.dtype == jnp.bool_
        T = x_seq.shape[0]
        run = self._runners.get(T)
        if run is None:
            run = self._build_runner(T)
            self._runners[T] = run
        # bool -> int8 is 1-byte -> 1-byte glue; the f32 conversion and the
        # leaky update itself run inside the Pallas kernel.
        self.activation = run(self.activation, x_seq.astype(jnp.int8))
        return self.activation

    def forward(self, x):
        """Single-step forward with the original PyTorch module semantics."""
        assert x.shape == self.shape
        assert x.dtype == jnp.bool_
        return self.forward_sequence(x[None])


if __name__ == "__main__":
    key = jax.random.PRNGKey(0)
    shape = (5, 5)
    T = 8

    leaky = LeakyPallas(shape=shape, alpha=0.2, beta=0.9)

    # T spike masks processed in ONE fused pallas_call (grid=(T,)).
    x_seq = jax.random.bernoulli(key, p=0.5, shape=(T,) + shape)
    out = leaky.forward_sequence(x_seq)
    out = jax.block_until_ready(out)

    # Also exercise the single-step path (original forward() semantics).
    k_step = jax.random.fold_in(key, 1)
    x_step = jax.random.bernoulli(k_step, p=0.5, shape=shape)
    out2 = jax.block_until_ready(leaky.forward(x_step))

    # Pure-JAX reference of the same T+1 updates.
    ref = jnp.zeros(shape, jnp.float32)
    for x in list(x_seq) + [x_step]:
        ref = 0.9 * ref
        ref = ref + (1.0 - ref) * 0.2 * x.astype(jnp.float32)
    assert jnp.allclose(out2, ref, atol=1e-6), (out2, ref)

    print("KERNEL_OK")
</pallas_src>

<mosaic_0001>
module attributes {stable_mosaic.version = 11 : i64} {
  func.func @_leaky_seq_kernel(%arg0: i32, %arg1: memref<5x5xf32, #tpu.memory_space<vmem>>, %arg2: memref<1x5x5xi8, #tpu.memory_space<vmem>>, %arg3: memref<5x5xf32, #tpu.memory_space<vmem>>) attributes {dimension_semantics = [#tpu.dimension_semantics<arbitrary>], iteration_bounds = array<i64: 8>, scalar_prefetch = 0 : i64, scratch_operands = 0 : i64, tpu.core_type = #tpu.core_type<tc>, window_params = [{pipeline_mode = #tpu.pipeline_mode<synchronous>, transform_indices = @transform_0, window_bounds = array<i64: 5, 5>}, {transform_indices = @transform_1, window_bounds = array<i64: 1, 5, 5>}, {pipeline_mode = #tpu.pipeline_mode<synchronous>, transform_indices = @transform_2, window_bounds = array<i64: 5, 5>}]} {
    %c0_i32 = arith.constant 0 : i32
    %0 = arith.cmpi eq, %arg0, %c0_i32 : i32
    %1 = arith.extui %0 : i1 to i32
    %c0_i32_0 = arith.constant 0 : i32
    %2 = arith.cmpi ne, %1, %c0_i32_0 : i32
    scf.if %2 {
      %c0_9 = arith.constant 0 : index
      %c0_10 = arith.constant 0 : index
      %17 = vector.load %arg1[%c0_9, %c0_10] : memref<5x5xf32, #tpu.memory_space<vmem>>, vector<5x5xf32>
      %c0_11 = arith.constant 0 : index
      %c0_12 = arith.constant 0 : index
      %18 = vector.load %arg3[%c0_11, %c0_12] : memref<5x5xf32, #tpu.memory_space<vmem>>, vector<5x5xf32>
      tpu.vector_store %arg3[%c0_11, %c0_12], %17 {strides = array<i32>} : memref<5x5xf32, #tpu.memory_space<vmem>>, vector<5x5xf32>,
    } else {
    }
    %c0 = arith.constant 0 : index
    %c0_1 = arith.constant 0 : index
    %3 = vector.load %arg3[%c0, %c0_1] : memref<5x5xf32, #tpu.memory_space<vmem>>, vector<5x5xf32>
    %cst = arith.constant 0.899999976 : f32
    %4 = vector.broadcast %cst : f32 to vector<5x5xf32>
    %5 = arith.mulf %4, %3 : vector<5x5xf32>
    %cst_2 = arith.constant 1.000000e+00 : f32
    %6 = vector.broadcast %cst_2 : f32 to vector<5x5xf32>
    %7 = arith.subf %6, %5 : vector<5x5xf32>
    %cst_3 = arith.constant 2.000000e-01 : f32
    %8 = vector.broadcast %cst_3 : f32 to vector<5x5xf32>
    %9 = arith.mulf %7, %8 : vector<5x5xf32>
    %10 = arith.addf %5, %9 : vector<5x5xf32>
    %c0_4 = arith.constant 0 : index
    %c0_5 = arith.constant 0 : index
    %c0_6 = arith.constant 0 : index
    %11 = vector.load %arg2[%c0_4, %c0_5, %c0_6] : memref<1x5x5xi8, #tpu.memory_space<vmem>>, vector<1x5x5xi8>
    %12 = vector.shape_cast %11 : vector<1x5x5xi8> to vector<5x5xi8>
    %c0_i8 = arith.constant 0 : i8
    %13 = vector.broadcast %c0_i8 : i8 to vector<5x5xi8>
    %14 = arith.cmpi ne, %12, %13 : vector<5x5xi8>
    %15 = arith.select %14, %10, %5 : vector<5x5xi1>, vector<5x5xf32>
    %c0_7 = arith.constant 0 : index
    %c0_8 = arith.constant 0 : index
    %16 = vector.load %arg3[%c0_7, %c0_8] : memref<5x5xf32, #tpu.memory_space<vmem>>, vector<5x5xf32>
    tpu.vector_store %arg3[%c0_7, %c0_8], %15 {strides = array<i32>} : memref<5x5xf32, #tpu.memory_space<vmem>>, vector<5x5xf32>,
    return
  }
  func.func @transform_0(%arg0: i32) -> (i32, i32) {
    %c0_i32 = arith.constant 0 : i32
    %c0_i32_0 = arith.constant 0 : i32
    %c0_i32_1 = arith.constant 0 : i32
    return %c0_i32, %c0_i32_0 : i32, i32
  }
  func.func @transform_1(%arg0: i32) -> (i32, i32, i32) {
    %c0_i32 = arith.constant 0 : i32
    %c0_i32_0 = arith.constant 0 : i32
    %c0_i32_1 = arith.constant 0 : i32
    return %arg0, %c0_i32, %c0_i32_0 : i32, i32, i32
  }
  func.func @transform_2(%arg0: i32) -> (i32, i32) {
    %c0_i32 = arith.constant 0 : i32
    %c0_i32_0 = arith.constant 0 : i32
    %c0_i32_1 = arith.constant 0 : i32
    return %c0_i32, %c0_i32_0 : i32, i32
  }
}

</mosaic_0001>

<llo_original>
// kernel: run.1
$region0: #{run.1}
  #allocation0 [shape = 'u32[]', space=smem, size = 0x4, offset = 0x4, fixed_abs, tag = 'smem constant byte address 0x4 - core index']
  #allocation1 [shape = 'u32[144,128]{1,0:T(1,128)}', space=vmem, size = 0x12000, scoped, tag = 'internal scratch']
  %s0 = inlined_call_operand.hbm [shape: f32[5,5], index: 0, kind: input, shape index: {}, may-alias: {0,2}]
  %s1 = inlined_call_operand.vmem [shape: s8[8,5,5], index: 1, kind: input, shape index: {}]
  %s2 = inlined_call_operand.hbm [shape: f32[5,5], index: 2, kind: output, shape index: {}, may-alias: {0,2}]
  %s3 = sld [smem:[#allocation0]]
  $region49: #{run.1} parent=0
    _
  %s5 = ssub.s32 1, %s3
  %s6 = scalar_select 0, %s5, %s3
  $region1: #{run.1} parent=0
    #allocation2 [shape = 'u8[4096]{0}', space=vmem, size = 0x1000, scoped, tag = 'input window, operand 0, single buffered']
    #allocation3 [shape = 's32[2]{0}', space=sflag, size = 0x8, scoped, tag = 'scoped memory for run.1']
    #allocation4 [shape = 's32[2]{0}', space=sflag, size = 0x8, scoped, tag = 'scoped memory for run.1']
    #allocation5 [shape = 'u8[4096]{0}', space=vmem, size = 0x1000, scoped, tag = 'output window, operand 0, single buffered']
    %7 = vsyncpa [#allocation3], 0
    %8 = vsyncpa [#allocation4], 0
    loop: start=0, step=1, limit=10
    $region2: #{run.1} parent=1 // loop_pre_header
      _
    $region3: #{run.1} parent=1 // loop_header
      %s10 = sphi 0, %s14
      %p11 = scmp.ge.s32.totalorder %s10, 10
      %s18 = sphi 0, %s18
      %s20 = sphi 0, %s18
      %s21 = sphi 0, %s20
      %s35 = sphi 0, %s21
      %s41 = sphi 0, %s43
      %s44 = sphi 0, %s41
      %s45 = sphi 0, %s44
      %s61 = sphi 0, %s45
      %s65 = sphi 0, %s65
      %s67 = sphi 0, %s65
      %s68 = sphi 0, %s67
      %s82 = sphi 0, %s68
    $region4: #{run.1} parent=1 // loop_header_branch
      %13 = sbr.rel (%p11) target = $region8
    $region5: #{run.1} parent=1 // loop_body
      %s15 = ssub.s32 %s10, 1
      %s16 = ssub.s32 %s10, 2
      %s17 = sadd.s32 %s10, 1
      %s19 = sadd.s32 %s18, 1
      %p22 = scmp.eq.s32.totalorder %s10, 7
      %p23 = scmp.ne.s32.totalorder %s18, %s20
      %p24 = scmp.eq.s32.totalorder %s10, 0
      %p25 = por %p23, %p24
      %p26 = scmp.ne.s32.totalorder %s18, %s20
      %p27 = scmp.eq.s32.totalorder %s15, 7
      %p28 = por %p26, %p27
      %p29 = scmp.ne.s32.totalorder %s20, %s21
      %p30 = scmp.eq.s32.totalorder %s15, 0
      %p31 = por %p29, %p30
      %p32 = scmp.ne.s32.totalorder %s20, %s21
      %p33 = scmp.eq.s32.totalorder %s16, 7
      %p34 = por %p32, %p33
      %p36 = scmp.ne.s32.totalorder %s21, %s35
      %p37 = scmp.eq.s32.totalorder %s16, 0
      %p38 = por %p36, %p37
      %s39 = ssub.s32 %s10, %s17
      %p40 = scmp.eq.s32.totalorder %s39, 0
      %s42 = sadd.s32 %s41, 1
      %s43 = scalar_select %p40, %s41, %s42
      %p46 = pneg %p40
      %p47 = scmp.eq.s32.totalorder %s10, 7
      %p48 = por %p46, %p47
      %p49 = scmp.ne.s32.totalorder %s41, %s44
      %p50 = scmp.eq.s32.totalorder %s10, 0
      %p51 = por %p49, %p50
      %p52 = scmp.ne.s32.totalorder %s41, %s44
      %p53 = scmp.eq.s32.totalorder %s15, 7
      %p54 = por %p52, %p53
      %p55 = scmp.ne.s32.totalorder %s44, %s45
      %p56 = scmp.eq.s32.totalorder %s15, 0
      %p57 = por %p55, %p56
      %p58 = scmp.ne.s32.totalorder %s44, %s45
      %p59 = scmp.eq.s32.totalorder %s16, 7
      %p60 = por %p58, %p59
      %p62 = scmp.ne.s32.totalorder %s45, %s61
      %p63 = scmp.eq.s32.totalorder %s16, 0
      %p64 = por %p62, %p63
      %s66 = sadd.s32 %s65, 1
      %p69 = scmp.eq.s32.totalorder %s10, 7
      %p70 = scmp.ne.s32.totalorder %s65, %s67
      %p71 = scmp.eq.s32.totalorder %s10, 0
      %p72 = por %p70, %p71
      %p73 = scmp.ne.s32.totalorder %s65, %s67
      %p74 = scmp.eq.s32.totalorder %s15, 7
      %p75 = por %p73, %p74
      %p76 = scmp.ne.s32.totalorder %s67, %s68
      %p77 = scmp.eq.s32.totalorder %s15, 0
      %p78 = por %p76, %p77
      %p79 = scmp.ne.s32.totalorder %s67, %s68
      %p80 = scmp.eq.s32.totalorder %s16, 7
      %p81 = por %p79, %p80
      %p83 = scmp.ne.s32.totalorder %s68, %s82
      %p84 = scmp.eq.s32.totalorder %s16, 0
      %p85 = por %p83, %p84
      %p86 = scmp.le.s32.totalorder 1, %s10
      %p87 = scmp.lt.s32.totalorder %s10, 9
      %p88 = pnand %p86, %p87
      %p89 = pneg %p88
      // Predicated region
      $region9: #{run.1} parent=5 // pred_check
        _
      $region10: #{run.1} parent=5 // pred_check_branch
        %91 = sbr.rel (%p88) target = $region12
      $region11: #{run.1} parent=5 // pred_region
        %s92 = ssub.s32 %s10, 1
        // Predicated region
        $region13: #{run.1} parent=11 // pred_check
          %p93 = pneg %p31
        $region14: #{run.1} parent=11 // pred_check_branch
          %95 = sbr.rel (%p93) target = $region16
        $region15: #{run.1} parent=11 // pred_region
          %s97 = ssub.s32 128, 128
          %98 = vsyncadd [#allocation3], %s97
          %s100 = sshll.u32 [#allocation2], 4
          %s101 = int_to_ptr.vmem [resolvable:$true] %s100
          %103 = dma.hbm_to_vmem [thread:$0]  %s0, 128, %s101, [#allocation3]
        $region16: #{run.1} parent=11 // pred_fallthru
          _
      $region12: #{run.1} parent=5 // pred_fallthru
        _
      %p104 = scmp.lt.s32.totalorder %s10, 8
      // Predicated region
      $region17: #{run.1} parent=5 // pred_check
        %p105 = pneg %p104
      $region18: #{run.1} parent=5 // pred_check_branch
        %107 = sbr.rel (%p105) target = $region20
      $region19: #{run.1} parent=5 // pred_region
        // Predicated region
        $region21: #{run.1} parent=19 // pred_check
          %p108 = pneg %p51
        $region22: #{run.1} parent=19 // pred_check_branch
          %110 = sbr.rel (%p108) target = $region24
        $region23: #{run.1} parent=19 // pred_region
          %p111 = scmp.lt.s32.totalorder %s10, 7
          %s112 = scalar_select %p111, %s10, 7
          %s113 = smul.addr %s112, 2
          %s114 = scalar_lea.vmem %s1, %s113
        $region24: #{run.1} parent=19 // pred_fallthru
          _
      $region20: #{run.1} parent=5 // pred_fallthru
        _
      %p115 = scmp.le.s32.totalorder 1, %s10
      %p116 = scmp.lt.s32.totalorder %s10, 9
      %p117 = pnand %p115, %p116
      %p118 = pneg %p117
      // Predicated region
      $region25: #{run.1} parent=5 // pred_check
        _
      $region26: #{run.1} parent=5 // pred_check_branch
        %120 = sbr.rel (%p117) target = $region28
      $region27: #{run.1} parent=5 // pred_region
        %s121 = ssub.s32 %s10, 1
        // Predicated region
        $region29: #{run.1} parent=27 // pred_check
          %p122 = pneg %p31
        $region30: #{run.1} parent=27 // pred_check_branch
          %124 = sbr.rel (%p122) target = $region32
        $region31: #{run.1} parent=27 // pred_region
          %125 = dma.done [#allocation3], 128
        $region32: #{run.1} parent=27 // pred_fallthru
          _
        %p126 = pneg %p31
        %p127 = pneg %p28
        %p128 = scmp.lt.s32.totalorder %s15, 7
        %s129 = scalar_select %p128, %s15, 7
        %s130 = smul.addr %s129, 2
        %s131 = scalar_lea.vmem %s1, %s130
        %p132 = pneg %p57
        %p133 = pneg %p54
        %p134 = pneg %p78
        %p135 = pneg %p75
        %p136 = scmp.lt.s32.totalorder %s15, 7
        %s137 = scalar_select %p136, %s15, 7
        %s138 = smul.addr %s137, 2
        %s139 = scalar_lea.vmem %s1, %s138
        %p142 = scmp.eq.s32.totalorder %s15, 0
        // Predicated region
        $region33: #{run.1} parent=27 // pred_check
          %p143 = pneg %p142
        $region34: #{run.1} parent=27 // pred_check_branch
          %145 = sbr.rel (%p143) target = $region36
        $region35: #{run.1} parent=27 // pred_region
          %v146 = vld [vmem:[#allocation2] sm:$0x1f]
          %vm147 = vcmask 36864
          %148 = vst.msk [vmem:[#allocation5] sm:$0x1f] %vm147, %v146
        $region36: #{run.1} parent=27 // pred_fallthru
          _
        %v149 = vld [vmem:[#allocation5] sm:$0x1f]
        %v150 = vmul.f32 %v149, 0.9
        %v151 = vsub.f32 1.0, %v150
        %v152 = vmul.f32 %v151, 0.2
        %v153 = vadd.f32 %v150, %v152
        %v154 = vld [vmem:[%s139] sm:$0x3]
        %vm155 = vnez %v154
        %v156 = vsel %vm155, 16843009, 0
        %v157 = vunpack.c.0.s8 %v156
        %vm158 = vcmp.ne.s32.totalorder %v157, 0
        %v159 = vsel %vm158, %v153, %v150
        %vm160 = vcmask 36864
        %161 = vst.msk [vmem:[#allocation5] sm:$0x1f] %vm160, %v159
        // Predicated region
        $region37: #{run.1} parent=27 // pred_check
          %p162 = pneg %p75
        $region38: #{run.1} parent=27 // pred_check_branch
          %164 = sbr.rel (%p162) target = $region40
        $region39: #{run.1} parent=27 // pred_region
          %s166 = ssub.s32 128, 128
          %167 = vsyncadd [#allocation4], %s166
          %s169 = sshll.u32 [#allocation5], 4
          %s170 = int_to_ptr.vmem [resolvable:$true] %s169
          %172 = dma.vmem_to_hbm [thread:$0]  %s170, 128, %s2, [#allocation4]
        $region40: #{run.1} parent=27 // pred_fallthru
          _
        // Predicated region
        $region41: #{run.1} parent=27 // pred_check
          %p173 = pneg %p75
        $region42: #{run.1} parent=27 // pred_check_branch
          %175 = sbr.rel (%p173) target = $region44
        $region43: #{run.1} parent=27 // pred_region
          %176 = dma.done [#allocation4], 128
        $region44: #{run.1} parent=27 // pred_fallthru
          _
      $region28: #{run.1} parent=5 // pred_fallthru
        _
      %p177 = scmp.le.s32.totalorder 2, %s10
      // Predicated region
      $region45: #{run.1} parent=5 // pred_check
        %p178 = pneg %p177
      $region46: #{run.1} parent=5 // pred_check_branch
        %180 = sbr.rel (%p178) target = $region48
      $region47: #{run.1} parent=5 // pred_region
        %s181 = ssub.s32 %s10, 2
      $region48: #{run.1} parent=5 // pred_fallthru
        _
    $region6: #{run.1} parent=1 // loop_footer
      %s14 = sadd.s32 1, %s10
    $region7: #{run.1} parent=1 // loop_footer_branch
      %9 = sbr.rel target = $region3
    $region8: #{run.1} parent=1 // loop_exit
      _
    %182 = vsyncpa [#allocation3], 1
    %s183 = scalar_lea.sflag [#allocation3], 1
    %184 = vsyncpa %s183, 1
    %185 = vsyncpa [#allocation4], 1
    %s186 = scalar_lea.sflag [#allocation4], 1
    %187 = vsyncpa %s186, 1

</llo_original>
